<compile_context>
chip_gen: v6e
topology: v6e:2x2x1
jax: 0.10.0
libtpu: 0.0.40
codegen_flags: <defaults>
</compile_context>

<pallas_src>
import jax
import jax.numpy as jnp
from jax.experimental import pallas as pl
from jax.experimental.pallas import tpu as pltpu


# ----------------------------------------------------------------------------
# Fused kernel: conv1(cat)+BN1+ReLU -> conv2+BN2+sigmoid -> s*x2 + x1
# ----------------------------------------------------------------------------
def _make_sab_kernel(b_blk):
    """Build the fused kernel for a (b_blk, C, T) data block."""

    def kernel(x1_ref, x2_ref, w1a_ref, w1b_ref, b1_ref, w2_ref, b2_ref, o_ref):
        w1a = w1a_ref[...]          # (cout, C1)  BN1-folded
        w1b = w1b_ref[...]          # (cout, C2)  BN1-folded
        b1 = b1_ref[...]            # (cout, 1)
        w2 = w2_ref[...]            # (cout, cout) BN2-folded
        b2 = b2_ref[...]            # (cout, 1)
        # TODO(synk): for tiny channel counts an unrolled VPU (scalar-broadcast
        # FMA) formulation could replace these MXU dots; the kernel is HBM /
        # step-overhead bound so the proven MXU path is kept.
        for b in range(b_blk):      # small static batch block, amortizes step overhead
            x1 = x1_ref[b].astype(jnp.float32)   # (C, T): spatial lane-dense
            x2 = x2_ref[b].astype(jnp.float32)
            # conv1(cat(x1,x2)) == W1a @ x1 + W1b @ x2
            h = (jnp.dot(w1a, x1, preferred_element_type=jnp.float32)
                 + jnp.dot(w1b, x2, preferred_element_type=jnp.float32)
                 + b1)
            h = jnp.maximum(h, 0.0)                                    # ReLU
            z = jnp.dot(w2, h, preferred_element_type=jnp.float32) + b2
            s = jax.nn.sigmoid(z)
            o_ref[b] = (s * x2 + x1).astype(o_ref.dtype)               # s*x2 + x1

    return kernel


# ----------------------------------------------------------------------------
# Wrapper helpers: BN folding, VMEM-budgeted tiling
# ----------------------------------------------------------------------------
def _fold_bn(w, b, gamma, beta, mean, var, eps=1e-5):
    # BN(Wx + b) = (scale*W) x + (scale*(b - mean) + beta)
    scale = gamma / jnp.sqrt(var + eps)
    return w * scale[:, None], scale * (b - mean) + beta


def _vmem_plan():
    """Generation-aware VMEM budget: (streamed-block budget, vmem_limit_bytes)."""
    try:
        cap = int(pltpu.get_tpu_info().vmem_capacity_bytes)
    except Exception:
        cap = 64 * 1024 * 1024          # conservative fallback (v7x per-TC VMEM)
    cap = min(cap, 128 * 1024 * 1024)   # v5e/v6e: 128 MiB, v7x: 64 MiB
    return int(cap * 0.40), int(cap * 0.85)


def _choose_tiling(n, c1, c2, cout, hw_pad, itemsize, budget):
    """Pick (batch block, spatial tile): biggest tiles that fit the VMEM budget."""
    lane = 128
    n_lanes = hw_pad // lane

    def step_vmem(b_blk, t):
        io = 2 * b_blk * t * (c1 + c2 + cout) * itemsize   # double-buffered blocks
        tmp = t * ((c1 + c2) * 4 + 4 * cout * 4)           # in-kernel f32 temps
        return io + tmp

    # Largest multiple-of-128 tile dividing hw_pad that fits the budget.
    t_tile = lane
    for d in range(1, n_lanes + 1):
        if n_lanes % d == 0 and step_vmem(1, d * lane) <= budget:
            t_tile = d * lane
    # Grow the batch block (divisor of n) inside the budget.
    b_blk = 1
    for b in range(1, n + 1):
        if n % b == 0 and step_vmem(b, t_tile) <= budget:
            b_blk = b
    # Keep >= 2 grid steps (when possible) so v7x megacore can shard the grid.
    if (n // b_blk) * (hw_pad // t_tile) < 2:
        if n > 1:
            b_blk = max(d for d in range(1, n) if n % d == 0)
        elif n_lanes > 1:
            t_tile = max(d * lane for d in range(1, n_lanes) if n_lanes % d == 0)
    return b_blk, t_tile


# ----------------------------------------------------------------------------
# Forward
# ----------------------------------------------------------------------------
def sab_forward(x1_nchw, x2_nchw, p):
    N, C1, H, W = x1_nchw.shape
    N2, C2, H2, W2 = x2_nchw.shape
    assert (N, H, W) == (N2, H2, W2)
    cout = p["w1"].shape[0]
    assert p["w1"].shape[1] == C1 + C2
    # Residual `s * x2 + x1` requires matching channel counts.
    # TODO(synk): broadcasting channel configs (C1 or C2 == 1) not implemented.
    assert cout == C1 == C2
    out_dtype = x1_nchw.dtype

    f32 = jnp.float32
    w1f, b1f = _fold_bn(p["w1"][:, :, 0, 0].astype(f32), p["b1"].astype(f32),
                        p["g1"].astype(f32), p["be1"].astype(f32),
                        p["m1"].astype(f32), p["v1"].astype(f32))
    w2f, b2f = _fold_bn(p["w2"][:, :, 0, 0].astype(f32), p["b2"].astype(f32),
                        p["g2"].astype(f32), p["be2"].astype(f32),
                        p["m2"].astype(f32), p["v2"].astype(f32))
    w1a, w1b = w1f[:, :C1], w1f[:, C1:]        # conv1 columns for x1 / x2

    HW = H * W
    HW_pad = ((HW + 127) // 128) * 128
    # Keep native dtype on the streamed tensors (no wrapper upcast); reshape is free.
    x1 = x1_nchw.reshape(N, C1, HW)
    x2 = x2_nchw.reshape(N, C2, HW)
    if HW_pad != HW:                           # lane-align: pad, slice off after
        pad = ((0, 0), (0, 0), (0, HW_pad - HW))
        x1 = jnp.pad(x1, pad)
        x2 = jnp.pad(x2, pad)

    budget, vmem_limit = _vmem_plan()
    itemsize = jnp.dtype(out_dtype).itemsize
    B_blk, T = _choose_tiling(N, C1, C2, cout, HW_pad, itemsize, budget)
    grid = (N // B_blk, HW_pad // T)

    def data_spec(c):
        return pl.BlockSpec((B_blk, c, T), lambda n, j: (n, 0, j))

    def param_spec(r, c):
        return pl.BlockSpec((r, c), lambda n, j: (0, 0))

    out = pl.pallas_call(
        _make_sab_kernel(B_blk),
        out_shape=jax.ShapeDtypeStruct((N, cout, HW_pad), out_dtype),
        grid_spec=pltpu.PrefetchScalarGridSpec(
            num_scalar_prefetch=0,
            grid=grid,
            in_specs=[
                data_spec(C1),                 # x1
                data_spec(C2),                 # x2
                param_spec(cout, C1),          # W1a (BN1-folded)
                param_spec(cout, C2),          # W1b (BN1-folded)
                param_spec(cout, 1),           # b1
                param_spec(cout, cout),        # W2  (BN2-folded)
                param_spec(cout, 1),           # b2
            ],
            out_specs=data_spec(cout),
        ),
        compiler_params=pltpu.CompilerParams(
            dimension_semantics=("parallel", "parallel"),   # megacore-friendly
            vmem_limit_bytes=vmem_limit,
        ),
    )(x1, x2, w1a, w1b, b1f.reshape(cout, 1), w2f, b2f.reshape(cout, 1))

    if HW_pad != HW:
        out = out[:, :, :HW]
    return out.reshape(N, cout, H, W)


# ----------------------------------------------------------------------------
# Pure-JAX reference (eval-mode BN) for correctness checks
# ----------------------------------------------------------------------------
def _sab_ref(x1, x2, p, eps=1e-5):
    def bn(y, g, be, m, v):
        return (y - m[None, :, None, None]) / jnp.sqrt(v[None, :, None, None] + eps) \
               * g[None, :, None, None] + be[None, :, None, None]

    x = jnp.concatenate([x1, x2], axis=1)
    y = jnp.einsum("oc,nchw->nohw", p["w1"][:, :, 0, 0], x) + p["b1"][None, :, None, None]
    y = jnp.maximum(bn(y, p["g1"], p["be1"], p["m1"], p["v1"]), 0.0)
    z = jnp.einsum("oc,nchw->nohw", p["w2"][:, :, 0, 0], y) + p["b2"][None, :, None, None]
    s = jax.nn.sigmoid(bn(z, p["g2"], p["be2"], p["m2"], p["v2"]))
    return s * x2 + x1


def _make_params(key, out_ch):
    in_ch = 2 * out_ch
    ks = jax.random.split(key, 12)
    f32 = jnp.float32
    return {
        "w1": 0.1 * jax.random.normal(ks[0], (out_ch, in_ch, 1, 1), f32),
        "b1": 0.1 * jax.random.normal(ks[1], (out_ch,), f32),
        "g1": 1.0 + 0.1 * jax.random.normal(ks[2], (out_ch,), f32),
        "be1": 0.1 * jax.random.normal(ks[3], (out_ch,), f32),
        "m1": 0.1 * jax.random.normal(ks[4], (out_ch,), f32),
        "v1": jax.random.uniform(ks[5], (out_ch,), f32, 0.5, 1.5),
        "w2": 0.1 * jax.random.normal(ks[6], (out_ch, out_ch, 1, 1), f32),
        "b2": 0.1 * jax.random.normal(ks[7], (out_ch,), f32),
        "g2": 1.0 + 0.1 * jax.random.normal(ks[8], (out_ch,), f32),
        "be2": 0.1 * jax.random.normal(ks[9], (out_ch,), f32),
        "m2": 0.1 * jax.random.normal(ks[10], (out_ch,), f32),
        "v2": jax.random.uniform(ks[11], (out_ch,), f32, 0.5, 1.5),
    }


if __name__ == "__main__":
    root = jax.random.PRNGKey(0)
    fwd = jax.jit(sab_forward)

    # Config 1: the canonical small shape (N=2, C=4, 16x16; HW multiple of 128).
    k0, k1, k2, k3, k4, k5 = jax.random.split(root, 6)
    p_a = _make_params(k0, out_ch=4)
    x1_a = jax.random.normal(k1, (2, 4, 16, 16), jnp.float32)
    x2_a = jax.random.normal(k2, (2, 4, 16, 16), jnp.float32)
    out_a = jax.block_until_ready(fwd(x1_a, x2_a, p_a))
    assert out_a.shape == (2, 4, 16, 16), out_a.shape
    assert out_a.dtype == x1_a.dtype
    assert bool(jnp.all(jnp.isfinite(out_a)))
    assert bool(jnp.allclose(out_a, _sab_ref(x1_a, x2_a, p_a), atol=1e-4, rtol=1e-4))

    # Config 2: exercises the lane-padding path (HW=64) and batch blocking (B_blk>1).
    p_b = _make_params(k3, out_ch=8)
    x1_b = jax.random.normal(k4, (4, 8, 8, 8), jnp.float32)
    x2_b = jax.random.normal(k5, (4, 8, 8, 8), jnp.float32)
    out_b = jax.block_until_ready(fwd(x1_b, x2_b, p_b))
    assert out_b.shape == (4, 8, 8, 8), out_b.shape
    assert bool(jnp.all(jnp.isfinite(out_b)))
    assert bool(jnp.allclose(out_b, _sab_ref(x1_b, x2_b, p_b), atol=1e-4, rtol=1e-4))

    print("KERNEL_OK")
</pallas_src>

<mosaic_0001>
module attributes {stable_mosaic.version = 11 : i64} {
  func.func @kernel(%arg0: i32, %arg1: i32, %arg2: memref<1x4x256xf32, #tpu.memory_space<vmem>>, %arg3: memref<1x4x256xf32, #tpu.memory_space<vmem>>, %arg4: memref<4x4xf32, #tpu.memory_space<vmem>>, %arg5: memref<4x4xf32, #tpu.memory_space<vmem>>, %arg6: memref<4x1xf32, #tpu.memory_space<vmem>>, %arg7: memref<4x4xf32, #tpu.memory_space<vmem>>, %arg8: memref<4x1xf32, #tpu.memory_space<vmem>>, %arg9: memref<1x4x256xf32, #tpu.memory_space<vmem>>) attributes {dimension_semantics = [#tpu.dimension_semantics<parallel>, #tpu.dimension_semantics<parallel>], iteration_bounds = array<i64: 2, 1>, scalar_prefetch = 0 : i64, scratch_operands = 0 : i64, tpu.core_type = #tpu.core_type<tc>, window_params = [{transform_indices = @transform_0, window_bounds = array<i64: 1, 4, 256>}, {transform_indices = @transform_1, window_bounds = array<i64: 1, 4, 256>}, {pipeline_mode = #tpu.pipeline_mode<synchronous>, transform_indices = @transform_2, window_bounds = array<i64: 4, 4>}, {pipeline_mode = #tpu.pipeline_mode<synchronous>, transform_indices = @transform_3, window_bounds = array<i64: 4, 4>}, {pipeline_mode = #tpu.pipeline_mode<synchronous>, transform_indices = @transform_4, window_bounds = array<i64: 4, 1>}, {pipeline_mode = #tpu.pipeline_mode<synchronous>, transform_indices = @transform_5, window_bounds = array<i64: 4, 4>}, {pipeline_mode = #tpu.pipeline_mode<synchronous>, transform_indices = @transform_6, window_bounds = array<i64: 4, 1>}, {transform_indices = @transform_7, window_bounds = array<i64: 1, 4, 256>}]} {
    %c0 = arith.constant 0 : index
    %c0_0 = arith.constant 0 : index
    %0 = vector.load %arg4[%c0, %c0_0] : memref<4x4xf32, #tpu.memory_space<vmem>>, vector<4x4xf32>
    %c0_1 = arith.constant 0 : index
    %c0_2 = arith.constant 0 : index
    %1 = vector.load %arg5[%c0_1, %c0_2] : memref<4x4xf32, #tpu.memory_space<vmem>>, vector<4x4xf32>
    %c0_3 = arith.constant 0 : index
    %c0_4 = arith.constant 0 : index
    %2 = vector.load %arg6[%c0_3, %c0_4] : memref<4x1xf32, #tpu.memory_space<vmem>>, vector<4x1xf32>
    %c0_5 = arith.constant 0 : index
    %c0_6 = arith.constant 0 : index
    %3 = vector.load %arg7[%c0_5, %c0_6] : memref<4x4xf32, #tpu.memory_space<vmem>>, vector<4x4xf32>
    %c0_7 = arith.constant 0 : index
    %c0_8 = arith.constant 0 : index
    %4 = vector.load %arg8[%c0_7, %c0_8] : memref<4x1xf32, #tpu.memory_space<vmem>>, vector<4x1xf32>
    %c0_9 = arith.constant 0 : index
    %c0_10 = arith.constant 0 : index
    %c0_11 = arith.constant 0 : index
    %5 = vector.load %arg2[%c0_9, %c0_10, %c0_11] : memref<1x4x256xf32, #tpu.memory_space<vmem>>, vector<1x4x256xf32>
    %6 = vector.shape_cast %5 : vector<1x4x256xf32> to vector<4x256xf32>
    %c0_12 = arith.constant 0 : index
    %c0_13 = arith.constant 0 : index
    %c0_14 = arith.constant 0 : index
    %7 = vector.load %arg3[%c0_12, %c0_13, %c0_14] : memref<1x4x256xf32, #tpu.memory_space<vmem>>, vector<1x4x256xf32>
    %8 = vector.shape_cast %7 : vector<1x4x256xf32> to vector<4x256xf32>
    %cst = arith.constant dense<0.000000e+00> : vector<4x256xf32>
    %9 = tpu.matmul %0, %6, %cst {dimension_numbers = #tpu.dot_dimension_numbers<[1], [0], [0], [1], [0, 0, 1, 1], [], []>} : vector<4x4xf32>, vector<4x256xf32>, vector<4x256xf32> -> vector<4x256xf32>
    %cst_15 = arith.constant dense<0.000000e+00> : vector<4x256xf32>
    %10 = tpu.matmul %1, %8, %cst_15 {dimension_numbers = #tpu.dot_dimension_numbers<[1], [0], [0], [1], [0, 0, 1, 1], [], []>} : vector<4x4xf32>, vector<4x256xf32>, vector<4x256xf32> -> vector<4x256xf32>
    %11 = arith.addf %9, %10 : vector<4x256xf32>
    %12 = vector.broadcast %2 : vector<4x1xf32> to vector<4x256xf32>
    %13 = arith.addf %11, %12 : vector<4x256xf32>
    %cst_16 = arith.constant 0.000000e+00 : f32
    %14 = vector.broadcast %cst_16 : f32 to vector<4x256xf32>
    %15 = arith.maximumf %13, %14 : vector<4x256xf32>
    %cst_17 = arith.constant dense<0.000000e+00> : vector<4x256xf32>
    %16 = tpu.matmul %3, %15, %cst_17 {dimension_numbers = #tpu.dot_dimension_numbers<[1], [0], [0], [1], [0, 0, 1, 1], [], []>} : vector<4x4xf32>, vector<4x256xf32>, vector<4x256xf32> -> vector<4x256xf32>
    %17 = vector.broadcast %4 : vector<4x1xf32> to vector<4x256xf32>
    %18 = arith.addf %16, %17 : vector<4x256xf32>
    %19 = arith.negf %18 : vector<4x256xf32>
    %20 = math.exp %19 : vector<4x256xf32>
    %cst_18 = arith.constant 1.000000e+00 : f32
    %21 = vector.broadcast %cst_18 : f32 to vector<4x256xf32>
    %22 = arith.addf %21, %20 : vector<4x256xf32>
    %23 = arith.divf %21, %22 : vector<4x256xf32>
    %24 = arith.mulf %23, %8 : vector<4x256xf32>
    %25 = arith.addf %24, %6 : vector<4x256xf32>
    %c0_19 = arith.constant 0 : index
    %c0_20 = arith.constant 0 : index
    %c0_21 = arith.constant 0 : index
    %26 = vector.load %arg9[%c0_19, %c0_20, %c0_21] : memref<1x4x256xf32, #tpu.memory_space<vmem>>, vector<1x4x256xf32>
    %27 = vector.shape_cast %26 : vector<1x4x256xf32> to vector<4x256xf32>
    %28 = vector.shape_cast %25 : vector<4x256xf32> to vector<1x4x256xf32>
    tpu.vector_store %arg9[%c0_19, %c0_20, %c0_21], %28 {strides = array<i32>} : memref<1x4x256xf32, #tpu.memory_space<vmem>>, vector<1x4x256xf32>,
    return
  }
  func.func @transform_0(%arg0: i32, %arg1: i32) -> (i32, i32, i32) {
    %c0_i32 = arith.constant 0 : i32
    %c0_i32_0 = arith.constant 0 : i32
    return %arg0, %c0_i32, %arg1 : i32, i32, i32
  }
  func.func @transform_1(%arg0: i32, %arg1: i32) -> (i32, i32, i32) {
    %c0_i32 = arith.constant 0 : i32
    %c0_i32_0 = arith.constant 0 : i32
    return %arg0, %c0_i32, %arg1 : i32, i32, i32
  }
  func.func @transform_2(%arg0: i32, %arg1: i32) -> (i32, i32) {
    %c0_i32 = arith.constant 0 : i32
    %c0_i32_0 = arith.constant 0 : i32
    %c0_i32_1 = arith.constant 0 : i32
    return %c0_i32, %c0_i32_0 : i32, i32
  }
  func.func @transform_3(%arg0: i32, %arg1: i32) -> (i32, i32) {
    %c0_i32 = arith.constant 0 : i32
    %c0_i32_0 = arith.constant 0 : i32
    %c0_i32_1 = arith.constant 0 : i32
    return %c0_i32, %c0_i32_0 : i32, i32
  }
  func.func @transform_4(%arg0: i32, %arg1: i32) -> (i32, i32) {
    %c0_i32 = arith.constant 0 : i32
    %c0_i32_0 = arith.constant 0 : i32
    %c0_i32_1 = arith.constant 0 : i32
    return %c0_i32, %c0_i32_0 : i32, i32
  }
  func.func @transform_5(%arg0: i32, %arg1: i32) -> (i32, i32) {
    %c0_i32 = arith.constant 0 : i32
    %c0_i32_0 = arith.constant 0 : i32
    %c0_i32_1 = arith.constant 0 : i32
    return %c0_i32, %c0_i32_0 : i32, i32
  }
  func.func @transform_6(%arg0: i32, %arg1: i32) -> (i32, i32) {
    %c0_i32 = arith.constant 0 : i32
    %c0_i32_0 = arith.constant 0 : i32
    %c0_i32_1 = arith.constant 0 : i32
    return %c0_i32, %c0_i32_0 : i32, i32
  }
  func.func @transform_7(%arg0: i32, %arg1: i32) -> (i32, i32, i32) {
    %c0_i32 = arith.constant 0 : i32
    %c0_i32_0 = arith.constant 0 : i32
    return %arg0, %c0_i32, %arg1 : i32, i32, i32
  }
}

</mosaic_0001>

<llo_original>
// kernel: sab_forward.1
$region0: #{sab_forward.1}
  #allocation0 [shape = 'u32[]', space=smem, size = 0x4, offset = 0x4, fixed_abs, tag = 'smem constant byte address 0x4 - core index']
  #allocation1 [shape = 'u32[144,128]{1,0:T(1,128)}', space=vmem, size = 0x12000, scoped, tag = 'internal scratch']
  %s0 = inlined_call_operand.vmem [shape: f32[2,4,256], index: 0, kind: input, shape index: {}]
  %s1 = inlined_call_operand.vmem [shape: f32[2,4,256], index: 1, kind: input, shape index: {}]
  %s2 = inlined_call_operand.vmem [shape: f32[4,4], index: 2, kind: input, shape index: {}]
  %s3 = inlined_call_operand.vmem [shape: f32[4,4], index: 3, kind: input, shape index: {}]
  %s4 = inlined_call_operand.vmem [shape: f32[4,1], index: 4, kind: input, shape index: {}]
  %s5 = inlined_call_operand.vmem [shape: f32[4,4], index: 5, kind: input, shape index: {}]
  %s6 = inlined_call_operand.vmem [shape: f32[4,1], index: 6, kind: input, shape index: {}]
  %s7 = inlined_call_operand.vmem [shape: f32[2,4,256], index: 7, kind: output, shape index: {}]
  %s8 = sld [smem:[#allocation0]]
  $region61: #{sab_forward.1} parent=0
    _
  %s10 = ssub.s32 1, %s8
  %s11 = scalar_select 0, %s10, %s8
  loop: start=0, step=1, limit=4
  $region2: #{sab_forward.1} parent=0 // loop_pre_header
    _
  $region3: #{sab_forward.1} parent=0 // loop_header
    %s13 = sphi 0, %s17
    %p14 = scmp.ge.s32.totalorder %s13, 4
    %s20 = sphi 0, %s32
    %s21 = sphi 0, %s28
    %s22 = sphi 0, %s20
    %s23 = sphi 0, %s21
    %s24 = sphi 0, %s22
    %s25 = sphi 0, %s23
    %s37 = sphi 0, %s39
    %s40 = sphi 0, %s37
    %s41 = sphi 0, %s40
    %s57 = sphi 0, %s41
    %s65 = sphi 0, %s67
    %s68 = sphi 0, %s65
    %s69 = sphi 0, %s68
    %s85 = sphi 0, %s69
    %s89 = sphi 0, %s89
    %s91 = sphi 0, %s89
    %s92 = sphi 0, %s91
    %s106 = sphi 0, %s92
    %s110 = sphi 0, %s110
    %s112 = sphi 0, %s110
    %s113 = sphi 0, %s112
    %s127 = sphi 0, %s113
    %s131 = sphi 0, %s131
    %s133 = sphi 0, %s131
    %s134 = sphi 0, %s133
    %s148 = sphi 0, %s134
    %s152 = sphi 0, %s152
    %s154 = sphi 0, %s152
    %s155 = sphi 0, %s154
    %s169 = sphi 0, %s155
    %s173 = sphi 0, %s173
    %s175 = sphi 0, %s173
    %s176 = sphi 0, %s175
    %s190 = sphi 0, %s176
    %s198 = sphi 0, %s200
    %s201 = sphi 0, %s198
    %s202 = sphi 0, %s201
    %s218 = sphi 0, %s202
  $region4: #{sab_forward.1} parent=0 // loop_header_branch
    %16 = sbr.rel (%p14) target = $region8
  $region5: #{sab_forward.1} parent=0 // loop_body
    %s18 = ssub.s32 %s13, 1
    %s19 = ssub.s32 %s13, 2
    %s26 = sadd.s32 1, %s21
    %p27 = scmp.ge.s32.totalorder %s26, 1
    %s28 = scalar_select %p27, 0, %s26
    %s29 = sadd.s32 1, %s20
    %s30 = scalar_select %p27, %s29, %s20
    %p31 = scmp.ge.s32.totalorder %s30, 2
    %s32 = scalar_select %p31, 0, %s30
    %s33 = ssub.s32 %s20, %s32
    %s34 = ssub.s32 %s21, %s28
    %s35 = sor.u32 %s33, %s34
    %p36 = scmp.eq.s32.totalorder %s35, 0
    %s38 = sadd.s32 %s37, 1
    %s39 = scalar_select %p36, %s37, %s38
    %p42 = pneg %p36
    %p43 = scmp.eq.s32.totalorder %s13, 1
    %p44 = por %p42, %p43
    %p45 = scmp.ne.s32.totalorder %s37, %s40
    %p46 = scmp.eq.s32.totalorder %s13, 0
    %p47 = por %p45, %p46
    %p48 = scmp.ne.s32.totalorder %s37, %s40
    %p49 = scmp.eq.s32.totalorder %s18, 1
    %p50 = por %p48, %p49
    %p51 = scmp.ne.s32.totalorder %s40, %s41
    %p52 = scmp.eq.s32.totalorder %s18, 0
    %p53 = por %p51, %p52
    %p54 = scmp.ne.s32.totalorder %s40, %s41
    %p55 = scmp.eq.s32.totalorder %s19, 1
    %p56 = por %p54, %p55
    %p58 = scmp.ne.s32.totalorder %s41, %s57
    %p59 = scmp.eq.s32.totalorder %s19, 0
    %p60 = por %p58, %p59
    %s61 = ssub.s32 %s20, %s32
    %s62 = ssub.s32 %s21, %s28
    %s63 = sor.u32 %s61, %s62
    %p64 = scmp.eq.s32.totalorder %s63, 0
    %s66 = sadd.s32 %s65, 1
    %s67 = scalar_select %p64, %s65, %s66
    %p70 = pneg %p64
    %p71 = scmp.eq.s32.totalorder %s13, 1
    %p72 = por %p70, %p71
    %p73 = scmp.ne.s32.totalorder %s65, %s68
    %p74 = scmp.eq.s32.totalorder %s13, 0
    %p75 = por %p73, %p74
    %p76 = scmp.ne.s32.totalorder %s65, %s68
    %p77 = scmp.eq.s32.totalorder %s18, 1
    %p78 = por %p76, %p77
    %p79 = scmp.ne.s32.totalorder %s68, %s69
    %p80 = scmp.eq.s32.totalorder %s18, 0
    %p81 = por %p79, %p80
    %p82 = scmp.ne.s32.totalorder %s68, %s69
    %p83 = scmp.eq.s32.totalorder %s19, 1
    %p84 = por %p82, %p83
    %p86 = scmp.ne.s32.totalorder %s69, %s85
    %p87 = scmp.eq.s32.totalorder %s19, 0
    %p88 = por %p86, %p87
    %s90 = sadd.s32 %s89, 1
    %p93 = scmp.eq.s32.totalorder %s13, 1
    %p94 = scmp.ne.s32.totalorder %s89, %s91
    %p95 = scmp.eq.s32.totalorder %s13, 0
    %p96 = por %p94, %p95
    %p97 = scmp.ne.s32.totalorder %s89, %s91
    %p98 = scmp.eq.s32.totalorder %s18, 1
    %p99 = por %p97, %p98
    %p100 = scmp.ne.s32.totalorder %s91, %s92
    %p101 = scmp.eq.s32.totalorder %s18, 0
    %p102 = por %p100, %p101
    %p103 = scmp.ne.s32.totalorder %s91, %s92
    %p104 = scmp.eq.s32.totalorder %s19, 1
    %p105 = por %p103, %p104
    %p107 = scmp.ne.s32.totalorder %s92, %s106
    %p108 = scmp.eq.s32.totalorder %s19, 0
    %p109 = por %p107, %p108
    %s111 = sadd.s32 %s110, 1
    %p114 = scmp.eq.s32.totalorder %s13, 1
    %p115 = scmp.ne.s32.totalorder %s110, %s112
    %p116 = scmp.eq.s32.totalorder %s13, 0
    %p117 = por %p115, %p116
    %p118 = scmp.ne.s32.totalorder %s110, %s112
    %p119 = scmp.eq.s32.totalorder %s18, 1
    %p120 = por %p118, %p119
    %p121 = scmp.ne.s32.totalorder %s112, %s113
    %p122 = scmp.eq.s32.totalorder %s18, 0
    %p123 = por %p121, %p122
    %p124 = scmp.ne.s32.totalorder %s112, %s113
    %p125 = scmp.eq.s32.totalorder %s19, 1
    %p126 = por %p124, %p125
    %p128 = scmp.ne.s32.totalorder %s113, %s127
    %p129 = scmp.eq.s32.totalorder %s19, 0
    %p130 = por %p128, %p129
    %s132 = sadd.s32 %s131, 1
    %p135 = scmp.eq.s32.totalorder %s13, 1
    %p136 = scmp.ne.s32.totalorder %s131, %s133
    %p137 = scmp.eq.s32.totalorder %s13, 0
    %p138 = por %p136, %p137
    %p139 = scmp.ne.s32.totalorder %s131, %s133
    %p140 = scmp.eq.s32.totalorder %s18, 1
    %p141 = por %p139, %p140
    %p142 = scmp.ne.s32.totalorder %s133, %s134
    %p143 = scmp.eq.s32.totalorder %s18, 0
    %p144 = por %p142, %p143
    %p145 = scmp.ne.s32.totalorder %s133, %s134
    %p146 = scmp.eq.s32.totalorder %s19, 1
    %p147 = por %p145, %p146
    %p149 = scmp.ne.s32.totalorder %s134, %s148
    %p150 = scmp.eq.s32.totalorder %s19, 0
    %p151 = por %p149, %p150
    %s153 = sadd.s32 %s152, 1
    %p156 = scmp.eq.s32.totalorder %s13, 1
    %p157 = scmp.ne.s32.totalorder %s152, %s154
    %p158 = scmp.eq.s32.totalorder %s13, 0
    %p159 = por %p157, %p158
    %p160 = scmp.ne.s32.totalorder %s152, %s154
    %p161 = scmp.eq.s32.totalorder %s18, 1
    %p162 = por %p160, %p161
    %p163 = scmp.ne.s32.totalorder %s154, %s155
    %p164 = scmp.eq.s32.totalorder %s18, 0
    %p165 = por %p163, %p164
    %p166 = scmp.ne.s32.totalorder %s154, %s155
    %p167 = scmp.eq.s32.totalorder %s19, 1
    %p168 = por %p166, %p167
    %p170 = scmp.ne.s32.totalorder %s155, %s169
    %p171 = scmp.eq.s32.totalorder %s19, 0
    %p172 = por %p170, %p171
    %s174 = sadd.s32 %s173, 1
    %p177 = scmp.eq.s32.totalorder %s13, 1
    %p178 = scmp.ne.s32.totalorder %s173, %s175
    %p179 = scmp.eq.s32.totalorder %s13, 0
    %p180 = por %p178, %p179
    %p181 = scmp.ne.s32.totalorder %s173, %s175
    %p182 = scmp.eq.s32.totalorder %s18, 1
    %p183 = por %p181, %p182
    %p184 = scmp.ne.s32.totalorder %s175, %s176
    %p185 = scmp.eq.s32.totalorder %s18, 0
    %p186 = por %p184, %p185
    %p187 = scmp.ne.s32.totalorder %s175, %s176
    %p188 = scmp.eq.s32.totalorder %s19, 1
    %p189 = por %p187, %p188
    %p191 = scmp.ne.s32.totalorder %s176, %s190
    %p192 = scmp.eq.s32.totalorder %s19, 0
    %p193 = por %p191, %p192
    %s194 = ssub.s32 %s20, %s32
    %s195 = ssub.s32 %s21, %s28
    %s196 = sor.u32 %s194, %s195
    %p197 = scmp.eq.s32.totalorder %s196, 0
    %s199 = sadd.s32 %s198, 1
    %s200 = scalar_select %p197, %s198, %s199
    %p203 = pneg %p197
    %p204 = scmp.eq.s32.totalorder %s13, 1
    %p205 = por %p203, %p204
    %p206 = scmp.ne.s32.totalorder %s198, %s201
    %p207 = scmp.eq.s32.totalorder %s13, 0
    %p208 = por %p206, %p207
    %p209 = scmp.ne.s32.totalorder %s198, %s201
    %p210 = scmp.eq.s32.totalorder %s18, 1
    %p211 = por %p209, %p210
    %p212 = scmp.ne.s32.totalorder %s201, %s202
    %p213 = scmp.eq.s32.totalorder %s18, 0
    %p214 = por %p212, %p213
    %p215 = scmp.ne.s32.totalorder %s201, %s202
    %p216 = scmp.eq.s32.totalorder %s19, 1
    %p217 = por %p215, %p216
    %p219 = scmp.ne.s32.totalorder %s202, %s218
    %p220 = scmp.eq.s32.totalorder %s19, 0
    %p221 = por %p219, %p220
    %p222 = scmp.le.s32.totalorder 1, %s13
    %p223 = scmp.lt.s32.totalorder %s13, 3
    %p224 = pnand %p222, %p223
    %p225 = pneg %p224
    // Predicated region
    $region9: #{sab_forward.1} parent=5 // pred_check
      _
    $region10: #{sab_forward.1} parent=5 // pred_check_branch
      %227 = sbr.rel (%p224) target = $region12
    $region11: #{sab_forward.1} parent=5 // pred_region
      %s228 = ssub.s32 %s13, 1
      // Predicated region
      $region13: #{sab_forward.1} parent=11 // pred_check
        %p229 = pneg %p102
      $region14: #{sab_forward.1} parent=11 // pred_check_branch
        %231 = sbr.rel (%p229) target = $region16
      $region15: #{sab_forward.1} parent=11 // pred_region
        _
      $region16: #{sab_forward.1} parent=11 // pred_fallthru
        _
      // Predicated region
      $region17: #{sab_forward.1} parent=11 // pred_check
        %p232 = pneg %p123
      $region18: #{sab_forward.1} parent=11 // pred_check_branch
        %234 = sbr.rel (%p232) target = $region20
      $region19: #{sab_forward.1} parent=11 // pred_region
        _
      $region20: #{sab_forward.1} parent=11 // pred_fallthru
        _
      // Predicated region
      $region21: #{sab_forward.1} parent=11 // pred_check
        %p235 = pneg %p144
      $region22: #{sab_forward.1} parent=11 // pred_check_branch
        %237 = sbr.rel (%p235) target = $region24
      $region23: #{sab_forward.1} parent=11 // pred_region
        _
      $region24: #{sab_forward.1} parent=11 // pred_fallthru
        _
      // Predicated region
      $region25: #{sab_forward.1} parent=11 // pred_check
        %p238 = pneg %p165
      $region26: #{sab_forward.1} parent=11 // pred_check_branch
        %240 = sbr.rel (%p238) target = $region28
      $region27: #{sab_forward.1} parent=11 // pred_region
        _
      $region28: #{sab_forward.1} parent=11 // pred_fallthru
        _
      // Predicated region
      $region29: #{sab_forward.1} parent=11 // pred_check
        %p241 = pneg %p186
      $region30: #{sab_forward.1} parent=11 // pred_check_branch
        %243 = sbr.rel (%p241) target = $region32
      $region31: #{sab_forward.1} parent=11 // pred_region
        _
      $region32: #{sab_forward.1} parent=11 // pred_fallthru
        _
    $region12: #{sab_forward.1} parent=5 // pred_fallthru
      _
    %p244 = scmp.lt.s32.totalorder %s13, 2
    // Predicated region
    $region33: #{sab_forward.1} parent=5 // pred_check
      %p245 = pneg %p244
    $region34: #{sab_forward.1} parent=5 // pred_check_branch
      %247 = sbr.rel (%p245) target = $region36
    $region35: #{sab_forward.1} parent=5 // pred_region
      // Predicated region
      $region37: #{sab_forward.1} parent=35 // pred_check
        %p248 = pneg %p47
      $region38: #{sab_forward.1} parent=35 // pred_check_branch
        %250 = sbr.rel (%p248) target = $region40
      $region39: #{sab_forward.1} parent=35 // pred_region
        %s251 = smul.u32 2, %s21
        %p252 = scmp.lt.s32.totalorder %s20, 1
        %s253 = scalar_select %p252, %s20, 1
        %p254 = scmp.lt.s32.totalorder %s251, 1
        %s255 = scalar_select %p254, %s251, 1
        %s256 = smul.addr %s253, 2
        %s257 = sadd.s32 %s255, %s256
        %s258 = smul.addr %s257, 4
        %s259 = scalar_lea.vmem %s0, %s258
        %s260 = smul.u32 2, %s21
      $region40: #{sab_forward.1} parent=35 // pred_fallthru
        _
      // Predicated region
      $region41: #{sab_forward.1} parent=35 // pred_check
        %p261 = pneg %p75
      $region42: #{sab_forward.1} parent=35 // pred_check_branch
        %263 = sbr.rel (%p261) target = $region44
      $region43: #{sab_forward.1} parent=35 // pred_region
        %s264 = smul.u32 2, %s21
        %p265 = scmp.lt.s32.totalorder %s20, 1
        %s266 = scalar_select %p265, %s20, 1
        %p267 = scmp.lt.s32.totalorder %s264, 1
        %s268 = scalar_select %p267, %s264, 1
        %s269 = smul.addr %s266, 2
        %s270 = sadd.s32 %s268, %s269
        %s271 = smul.addr %s270, 4
        %s272 = scalar_lea.vmem %s1, %s271
        %s273 = smul.u32 2, %s21
      $region44: #{sab_forward.1} parent=35 // pred_fallthru
        _
    $region36: #{sab_forward.1} parent=5 // pred_fallthru
      _
    %p274 = scmp.le.s32.totalorder 1, %s13
    %p275 = scmp.lt.s32.totalorder %s13, 3
    %p276 = pnand %p274, %p275
    %p277 = pneg %p276
    // Predicated region
    $region45: #{sab_forward.1} parent=5 // pred_check
      _
    $region46: #{sab_forward.1} parent=5 // pred_check_branch
      %279 = sbr.rel (%p276) target = $region48
    $region47: #{sab_forward.1} parent=5 // pred_region
      %s280 = ssub.s32 %s13, 1
      %s281 = smul.u32 2, %s23
      %p282 = scmp.lt.s32.totalorder %s22, 1
      %s283 = scalar_select %p282, %s22, 1
      %p284 = scmp.lt.s32.totalorder %s281, 1
      %s285 = scalar_select %p284, %s281, 1
      %s286 = smul.addr %s283, 2
      %s287 = sadd.s32 %s285, %s286
      %s288 = smul.addr %s287, 4
      %s289 = scalar_lea.vmem %s0, %s288
      %p290 = pneg %p53
      %p291 = pneg %p50
      %s292 = smul.u32 2, %s23
      %p293 = scmp.lt.s32.totalorder %s22, 1
      %s294 = scalar_select %p293, %s22, 1
      %p295 = scmp.lt.s32.totalorder %s292, 1
      %s296 = scalar_select %p295, %s292, 1
      %s297 = smul.addr %s294, 2
      %s298 = sadd.s32 %s296, %s297
      %s299 = smul.addr %s298, 4
      %s300 = scalar_lea.vmem %s1, %s299
      %p301 = pneg %p81
      %p302 = pneg %p78
      %p303 = pneg %p102
      %p304 = pneg %p99
      %p305 = pneg %p123
      %p306 = pneg %p120
      %p307 = pneg %p144
      %p308 = pneg %p141
      %p309 = pneg %p165
      %p310 = pneg %p162
      %p311 = pneg %p186
      %p312 = pneg %p183
      %p313 = pneg %p214
      %p314 = pneg %p211
      %s315 = smul.u32 2, %s23
      %p316 = scmp.lt.s32.totalorder %s22, 1
      %s317 = scalar_select %p316, %s22, 1
      %p318 = scmp.lt.s32.totalorder %s315, 1
      %s319 = scalar_select %p318, %s315, 1
      %s320 = smul.addr %s317, 2
      %s321 = sadd.s32 %s319, %s320
      %s322 = smul.addr %s321, 4
      %s323 = scalar_lea.vmem %s7, %s322
      %s324 = smul.u32 2, %s23
      %p325 = scmp.lt.s32.totalorder %s22, 1
      %s326 = scalar_select %p325, %s22, 1
      %p327 = scmp.lt.s32.totalorder %s324, 1
      %s328 = scalar_select %p327, %s324, 1
      %s329 = smul.addr %s326, 2
      %s330 = sadd.s32 %s328, %s329
      %s331 = smul.addr %s330, 4
      %s332 = scalar_lea.vmem %s0, %s331
      %s333 = smul.u32 2, %s23
      %s334 = smul.u32 2, %s23
      %p335 = scmp.lt.s32.totalorder %s22, 1
      %s336 = scalar_select %p335, %s22, 1
      %p337 = scmp.lt.s32.totalorder %s334, 1
      %s338 = scalar_select %p337, %s334, 1
      %s339 = smul.addr %s336, 2
      %s340 = sadd.s32 %s338, %s339
      %s341 = smul.addr %s340, 4
      %s342 = scalar_lea.vmem %s1, %s341
      %s343 = smul.u32 2, %s23
      %s344 = smul.u32 2, %s23
      %p345 = scmp.lt.s32.totalorder %s22, 1
      %s346 = scalar_select %p345, %s22, 1
      %p347 = scmp.lt.s32.totalorder %s344, 1
      %s348 = scalar_select %p347, %s344, 1
      %s349 = smul.addr %s346, 2
      %s350 = sadd.s32 %s348, %s349
      %s351 = smul.addr %s350, 4
      %s352 = scalar_lea.vmem %s7, %s351
      %s353 = smul.u32 2, %s23
      %v354 = vld [vmem:[%s2] sm:$0xf]
      %v355 = vld [vmem:[%s3] sm:$0xf]
      %v356 = vld [vmem:[%s4] sm:$0xf]
      %v357 = vld [vmem:[%s5] sm:$0xf]
      %v358 = vld [vmem:[%s6] sm:$0xf]
      %v359 = vld [vmem:[%s332] sm:$0xff]
      %v360 = vld [vmem:[%s342] sm:$0xff]
      %v362 = vcombine.high %v360, %v360
      %vm363 = vcmask 31744
      %v365 = vsel %vm363, %v355, 0
      %vm367 = vcmask 1043456
      %v368 = vsel %vm367, %v360, 0
      %v370 = vsel %vm367, %v362, 0
      %372 = vmatprep.subr.mxu0 0.0
      %373 = vmatpush1.msra.mxu0 0.0
      %374 = vmatprep.subr.mxu0 0.0
      %375 = vmatpush1.msra.mxu0 0.0
      %376 = vmatprep.subr.mxu0 0.0
      %377 = vmatpush1.msra.mxu0 0.0
      %378 = vmatprep.subr.mxu0 0.0
      %379 = vmatpush1.msra.mxu0 0.0
      %380 = vmatprep.subr.mxu0 0.0
      %381 = vmatpush1.msra.mxu0 0.0
      %382 = vmatprep.subr.mxu0 0.0
      %383 = vmatpush1.msra.mxu0 0.0
      %384 = vmatprep.subr.mxu0 0.0
      %385 = vmatpush1.msra.mxu0 0.0
      %386 = vmatprep.subr.mxu0 0.0
      %387 = vmatpush1.msra.mxu0 0.0
      %388 = vmatprep.subr.mxu0 0.0
      %389 = vmatpush1.msra.mxu0 0.0
      %390 = vmatprep.subr.mxu0 0.0
      %391 = vmatpush1.msra.mxu0 0.0
      %392 = vmatprep.subr.mxu0 0.0
      %393 = vmatpush1.msra.mxu0 0.0
      %394 = vmatprep.subr.mxu0 0.0
      %395 = vmatpush1.msra.mxu0 0.0
      %396 = vmatprep.subr.mxu0 0.0
      %397 = vmatpush1.msra.mxu0 0.0
      %398 = vmatprep.subr.mxu0 0.0
      %399 = vmatpush1.msra.mxu0 0.0
      %400 = vmatprep.subr.mxu0 0.0
      %401 = vmatpush1.msra.mxu0 0.0
      %402 = vmatprep.subr.mxu0 %v370
      %403 = vmatpush1.msra.mxu0 %v368
      %404 = vmatprep.subr.mxu0 0.0
      %405 = vmatpush2.msra.mxu0 0.0
      %406 = vmatprep.subr.mxu0 0.0
      %407 = vmatpush2.msra.mxu0 0.0
      %408 = vmatprep.subr.mxu0 0.0
      %409 = vmatpush2.msra.mxu0 0.0
      %410 = vmatprep.subr.mxu0 0.0
      %411 = vmatpush2.msra.mxu0 0.0
      %412 = vmatprep.subr.mxu0 0.0
      %413 = vmatpush2.msra.mxu0 0.0
      %414 = vmatprep.subr.mxu0 0.0
      %415 = vmatpush2.msra.mxu0 0.0
      %416 = vmatprep.subr.mxu0 0.0
      %417 = vmatpush2.msra.mxu0 0.0
      %418 = vmatprep.subr.mxu0 0.0
      %419 = vmatpush2.msra.mxu0 0.0
      %420 = vmatprep.subr.mxu0 0.0
      %421 = vmatpush2.msra.mxu0 0.0
      %422 = vmatprep.subr.mxu0 0.0
      %423 = vmatpush2.msra.mxu0 0.0
      %424 = vmatprep.subr.mxu0 0.0
      %425 = vmatpush2.msra.mxu0 0.0
      %426 = vmatprep.subr.mxu0 0.0
      %427 = vmatpush2.msra.mxu0 0.0
      %428 = vmatprep.subr.mxu0 0.0
      %429 = vmatpush2.msra.mxu0 0.0
      %430 = vmatprep.subr.mxu0 0.0
      %431 = vmatpush2.msra.mxu0 0.0
      %432 = vmatprep.subr.mxu0 0.0
      %433 = vmatpush2.msra.mxu0 0.0
      %434 = vmatprep.subr.mxu0 0.0
      %435 = vmatpush2.msra.mxu0 0.0
      %436 = vmatprep.mubr.f32.mxu0 0.0
      %437 = vmatmul.mubr.f32.gmra.mxu0 %v365
      %v438 = vpop.f32.mrf.mxu0
      %v439 = vadd.f32 0.0, %v438
      %v440 = vpop.f32.mrf.mxu0
      %v441 = vadd.f32 0.0, %v440
      %442 = vdwg.mxu0
      %v444 = vcombine.high %v359, %v359
      %v446 = vsel %vm363, %v354, 0
      %v448 = vsel %vm367, %v359, 0
      %v450 = vsel %vm367, %v444, 0
      %452 = vmatprep.subr.mxu0 0.0
      %453 = vmatpush1.msra.mxu0 0.0
      %454 = vmatprep.subr.mxu0 0.0
      %455 = vmatpush1.msra.mxu0 0.0
      %456 = vmatprep.subr.mxu0 0.0
      %457 = vmatpush1.msra.mxu0 0.0
      %458 = vmatprep.subr.mxu0 0.0
      %459 = vmatpush1.msra.mxu0 0.0
      %460 = vmatprep.subr.mxu0 0.0
      %461 = vmatpush1.msra.mxu0 0.0
      %462 = vmatprep.subr.mxu0 0.0
      %463 = vmatpush1.msra.mxu0 0.0
      %464 = vmatprep.subr.mxu0 0.0
      %465 = vmatpush1.msra.mxu0 0.0
      %466 = vmatprep.subr.mxu0 0.0
      %467 = vmatpush1.msra.mxu0 0.0
      %468 = vmatprep.subr.mxu0 0.0
      %469 = vmatpush1.msra.mxu0 0.0
      %470 = vmatprep.subr.mxu0 0.0
      %471 = vmatpush1.msra.mxu0 0.0
      %472 = vmatprep.subr.mxu0 0.0
      %473 = vmatpush1.msra.mxu0 0.0
      %474 = vmatprep.subr.mxu0 0.0
      %475 = vmatpush1.msra.mxu0 0.0
      %476 = vmatprep.subr.mxu0 0.0
      %477 = vmatpush1.msra.mxu0 0.0
      %478 = vmatprep.subr.mxu0 0.0
      %479 = vmatpush1.msra.mxu0 0.0
      %480 = vmatprep.subr.mxu0 0.0
      %481 = vmatpush1.msra.mxu0 0.0
      %482 = vmatprep.subr.mxu0 %v450
      %483 = vmatpush1.msra.mxu0 %v448
      %484 = vmatprep.subr.mxu0 0.0
      %485 = vmatpush2.msra.mxu0 0.0
      %486 = vmatprep.subr.mxu0 0.0
      %487 = vmatpush2.msra.mxu0 0.0
      %488 = vmatprep.subr.mxu0 0.0
      %489 = vmatpush2.msra.mxu0 0.0
      %490 = vmatprep.subr.mxu0 0.0
      %491 = vmatpush2.msra.mxu0 0.0
      %492 = vmatprep.subr.mxu0 0.0
      %493 = vmatpush2.msra.mxu0 0.0
      %494 = vmatprep.subr.mxu0 0.0
      %495 = vmatpush2.msra.mxu0 0.0
      %496 = vmatprep.subr.mxu0 0.0
      %497 = vmatpush2.msra.mxu0 0.0
      %498 = vmatprep.subr.mxu0 0.0
      %499 = vmatpush2.msra.mxu0 0.0
      %500 = vmatprep.subr.mxu0 0.0
      %501 = vmatpush2.msra.mxu0 0.0
      %502 = vmatprep.subr.mxu0 0.0
      %503 = vmatpush2.msra.mxu0 0.0
      %504 = vmatprep.subr.mxu0 0.0
      %505 = vmatpush2.msra.mxu0 0.0
      %506 = vmatprep.subr.mxu0 0.0
      %507 = vmatpush2.msra.mxu0 0.0
      %508 = vmatprep.subr.mxu0 0.0
      %509 = vmatpush2.msra.mxu0 0.0
      %510 = vmatprep.subr.mxu0 0.0
      %511 = vmatpush2.msra.mxu0 0.0
      %512 = vmatprep.subr.mxu0 0.0
      %513 = vmatpush2.msra.mxu0 0.0
      %514 = vmatprep.subr.mxu0 0.0
      %515 = vmatpush2.msra.mxu0 0.0
      %516 = vmatprep.mubr.f32.mxu0 0.0
      %517 = vmatmul.mubr.f32.gmra.mxu0 %v446
      %v518 = vpop.f32.mrf.mxu0
      %v519 = vadd.f32 %v439, %v518
      %v520 = vpop.f32.mrf.mxu0
      %v521 = vadd.f32 %v441, %v520
      %522 = vdwg.mxu0
      %524 = vset.pattern.permute.xlu0 0
      %525 = vperm.xlu0 %524, %v356
      %v526 = vpop.permute.xlu0 %525
      %v528 = vadd.f32 %v519, %v526
      %v529 = vadd.f32 %v521, %v526
      %v530 = vmax.f32 %v528, 0.0
      %v531 = vmax.f32 %v529, 0.0
      %533 = vset.pattern.permute.xlu0 0
      %534 = vperm.xlu0 %533, %v358
      %v535 = vpop.permute.xlu0 %534
      %v538 = vsel %vm363, %v357, 0
      %v541 = vsel %vm367, %v530, 0
      %v544 = vsel %vm367, %v531, 0
      %546 = vmatprep.subr.mxu0 0.0
      %547 = vmatpush1.msra.mxu0 0.0
      %548 = vmatprep.subr.mxu0 0.0
      %549 = vmatpush1.msra.mxu0 0.0
      %550 = vmatprep.subr.mxu0 0.0
      %551 = vmatpush1.msra.mxu0 0.0
      %552 = vmatprep.subr.mxu0 0.0
      %553 = vmatpush1.msra.mxu0 0.0
      %554 = vmatprep.subr.mxu0 0.0
      %555 = vmatpush1.msra.mxu0 0.0
      %556 = vmatprep.subr.mxu0 0.0
      %557 = vmatpush1.msra.mxu0 0.0
      %558 = vmatprep.subr.mxu0 0.0
      %559 = vmatpush1.msra.mxu0 0.0
      %560 = vmatprep.subr.mxu0 0.0
      %561 = vmatpush1.msra.mxu0 0.0
      %562 = vmatprep.subr.mxu0 0.0
      %563 = vmatpush1.msra.mxu0 0.0
      %564 = vmatprep.subr.mxu0 0.0
      %565 = vmatpush1.msra.mxu0 0.0
      %566 = vmatprep.subr.mxu0 0.0
      %567 = vmatpush1.msra.mxu0 0.0
      %568 = vmatprep.subr.mxu0 0.0
      %569 = vmatpush1.msra.mxu0 0.0
      %570 = vmatprep.subr.mxu0 0.0
      %571 = vmatpush1.msra.mxu0 0.0
      %572 = vmatprep.subr.mxu0 0.0
      %573 = vmatpush1.msra.mxu0 0.0
      %574 = vmatprep.subr.mxu0 0.0
      %575 = vmatpush1.msra.mxu0 0.0
      %576 = vmatprep.subr.mxu0 %v544
      %577 = vmatpush1.msra.mxu0 %v541
      %578 = vmatprep.subr.mxu0 0.0
      %579 = vmatpush2.msra.mxu0 0.0
      %580 = vmatprep.subr.mxu0 0.0
      %581 = vmatpush2.msra.mxu0 0.0
      %582 = vmatprep.subr.mxu0 0.0
      %583 = vmatpush2.msra.mxu0 0.0
      %584 = vmatprep.subr.mxu0 0.0
      %585 = vmatpush2.msra.mxu0 0.0
      %586 = vmatprep.subr.mxu0 0.0
      %587 = vmatpush2.msra.mxu0 0.0
      %588 = vmatprep.subr.mxu0 0.0
      %589 = vmatpush2.msra.mxu0 0.0
      %590 = vmatprep.subr.mxu0 0.0
      %591 = vmatpush2.msra.mxu0 0.0
      %592 = vmatprep.subr.mxu0 0.0
      %593 = vmatpush2.msra.mxu0 0.0
      %594 = vmatprep.subr.mxu0 0.0
      %595 = vmatpush2.msra.mxu0 0.0
      %596 = vmatprep.subr.mxu0 0.0
      %597 = vmatpush2.msra.mxu0 0.0
      %598 = vmatprep.subr.mxu0 0.0
      %599 = vmatpush2.msra.mxu0 0.0
      %600 = vmatprep.subr.mxu0 0.0
      %601 = vmatpush2.msra.mxu0 0.0
      %602 = vmatprep.subr.mxu0 0.0
      %603 = vmatpush2.msra.mxu0 0.0
      %604 = vmatprep.subr.mxu0 0.0
      %605 = vmatpush2.msra.mxu0 0.0
      %606 = vmatprep.subr.mxu0 0.0
      %607 = vmatpush2.msra.mxu0 0.0
      %608 = vmatprep.subr.mxu0 0.0
      %609 = vmatpush2.msra.mxu0 0.0
      %610 = vmatprep.mubr.f32.mxu0 0.0
      %611 = vmatmul.mubr.f32.gmra.mxu0 %v538
      %v612 = vpop.f32.mrf.mxu0
      %v613 = vadd.f32 %v535, %v612
      %v614 = vpop.f32.mrf.mxu0
      %v615 = vadd.f32 %v535, %v614
      %616 = vdwg.mxu0
      %v617 = vxor.u32 %v613, 2147483648
      %v618 = vxor.u32 %v615, 2147483648
      %v619 = vmul.f32 %v617, 1.442695
      %v620 = vpow.pop %v619
      %v621 = vmul.f32 %v618, 1.442695
      %v622 = vpow.pop %v621
      %v623 = vadd.f32 %v620, 1.0
      %v624 = vadd.f32 %v622, 1.0
      %v625 = vrcp.pop %v623
      %v626 = vmul.f32 1.0, %v625
      %v627 = vrcp.pop %v624
      %v628 = vmul.f32 1.0, %v627
      %v630 = vmul.f32 %v626, %v360
      %v631 = vmul.f32 %v628, %v362
      %v633 = vadd.f32 %v630, %v359
      %v634 = vadd.f32 %v631, %v444
      %v637 = vcombine.low %v633, %v634
      %639 = vst [vmem:[%s352] sm:$0xff] %v637
      %s640 = smul.u32 2, %s23
      %p641 = scmp.lt.s32.totalorder %s22, 1
      %s642 = scalar_select %p641, %s22, 1
      %p643 = scmp.lt.s32.totalorder %s640, 1
      %s644 = scalar_select %p643, %s640, 1
      %s645 = smul.addr %s642, 2
      %s646 = sadd.s32 %s644, %s645
      %s647 = smul.addr %s646, 4
      %s648 = scalar_lea.vmem %s7, %s647
      // Predicated region
      $region49: #{sab_forward.1} parent=47 // pred_check
        %p649 = pneg %p211
      $region50: #{sab_forward.1} parent=47 // pred_check_branch
        %651 = sbr.rel (%p649) target = $region52
      $region51: #{sab_forward.1} parent=47 // pred_region
        %s652 = smul.u32 2, %s23
      $region52: #{sab_forward.1} parent=47 // pred_fallthru
        _
    $region48: #{sab_forward.1} parent=5 // pred_fallthru
      _
    %p653 = scmp.le.s32.totalorder 2, %s13
    // Predicated region
    $region53: #{sab_forward.1} parent=5 // pred_check
      %p654 = pneg %p653
    $region54: #{sab_forward.1} parent=5 // pred_check_branch
      %656 = sbr.rel (%p654) target = $region56
    $region55: #{sab_forward.1} parent=5 // pred_region
      %s657 = ssub.s32 %s13, 2
      // Predicated region
      $region57: #{sab_forward.1} parent=55 // pred_check
        %p658 = pneg %p217
      $region58: #{sab_forward.1} parent=55 // pred_check_branch
        %660 = sbr.rel (%p658) target = $region60
      $region59: #{sab_forward.1} parent=55 // pred_region
        %s661 = smul.u32 2, %s25
        %p662 = scmp.lt.s32.totalorder %s24, 1
        %s663 = scalar_select %p662, %s24, 1
        %p664 = scmp.lt.s32.totalorder %s661, 1
        %s665 = scalar_select %p664, %s661, 1
        %s666 = smul.addr %s663, 2
        %s667 = sadd.s32 %s665, %s666
        %s668 = smul.addr %s667, 4
        %s669 = scalar_lea.vmem %s7, %s668
      $region60: #{sab_forward.1} parent=55 // pred_fallthru
        _
    $region56: #{sab_forward.1} parent=5 // pred_fallthru
      _
  $region6: #{sab_forward.1} parent=0 // loop_footer
    %s17 = sadd.s32 1, %s13
  $region7: #{sab_forward.1} parent=0 // loop_footer_branch
    %12 = sbr.rel target = $region3
  $region8: #{sab_forward.1} parent=0 // loop_exit
    _

</llo_original>
